<compile_context>
chip_gen: v7x
topology: tpu7x:2x2x1
jax: 0.10.0
libtpu: 0.0.40
codegen_flags: <defaults>
</compile_context>

<pallas_src>
import functools

import jax
import jax.numpy as jnp
from jax.experimental import pallas as pl
from jax.experimental.pallas import tpu as pltpu


_LANE = 128        # lane width of a vreg
_MAX_SUB = 256     # max sublanes per (SUB, 128) block -> 32768 elems / step
_SUB_ALIGN = 32    # keeps int8 blocks aligned to the (32, 128) int8 tile


def _cdiv(a, b):
    return -(-a // b)


def _round_up(a, b):
    return _cdiv(a, b) * b


def _plan(n):
    """Pick (sublanes per block, #blocks, padded element count) for n items."""
    rows = max(_cdiv(n, _LANE), 1)
    nb = _cdiv(rows, _MAX_SUB)
    sub = _round_up(_cdiv(rows, nb), _SUB_ALIGN)
    nblk = _cdiv(rows, sub)
    return sub, nblk, nblk * sub * _LANE


def _pad_rows(x, total, dtype=None):
    """Flatten, optionally cast, zero-pad to `total`, reshape to (rows, 128)."""
    flat = jnp.ravel(x)
    if dtype is not None:
        flat = flat.astype(dtype)
    pad = total - flat.shape[0]
    if pad:
        flat = jnp.pad(flat, (0, pad))
    return flat.reshape(-1, _LANE)


# ---------------------------------------------------------------------------
# Fused kernel: masked RGB L1 sum + masked BCE-with-logits sum + eikonal sum.
# ---------------------------------------------------------------------------
def _idr_kernel(nblk_p, nblk_g, m_pts,                 # static (Python ints)
                alpha_ref,                             # SMEM (1, 1) f32
                rgb_ref, gt_ref, and3_ref,             # (3*SUBp, 128)
                sdf_ref, om_ref, bcem_ref,             # (SUBp, 128)
                grad_ref,                              # (3, SUBg, 128)
                rgb_out, bce_out, eik_out,             # (1, 1) f32 each
                acc_rgb, acc_bce, acc_eik, gidx):      # VMEM scratch
    i = pl.program_id(0)
    n_steps = pl.num_programs(0)

    @pl.when(i == 0)
    def _init():
        acc_rgb[...] = jnp.zeros_like(acc_rgb)
        acc_bce[...] = jnp.zeros_like(acc_bce)
        acc_eik[...] = jnp.zeros_like(acc_eik)
        sub_g, lane = gidx.shape
        gidx[...] = (
            jax.lax.broadcasted_iota(jnp.int32, (sub_g, lane), 0) * lane
            + jax.lax.broadcasted_iota(jnp.int32, (sub_g, lane), 1))

    @pl.when(i < nblk_p)
    def _pixels():
        # --- RGB L1 over (network_object_mask & object_mask) ----------------
        diff = jnp.abs(rgb_ref[...].astype(jnp.float32)
                       - gt_ref[...].astype(jnp.float32))          # (3*SUBp,128)
        acc_rgb[...] += diff * and3_ref[...].astype(jnp.float32)

        # --- mask BCE-with-logits over ~(nm & om); target = object_mask -----
        alpha = alpha_ref[0, 0]
        x = -alpha * sdf_ref[...].astype(jnp.float32)               # (SUBp,128)
        z = om_ref[...].astype(jnp.float32)
        # stable bce_with_logits: max(x,0) - x*z + log(1 + exp(-|x|))
        bce = jnp.maximum(x, 0.0) - x * z + jnp.log1p(jnp.exp(-jnp.abs(x)))
        acc_bce[...] += bce * bcem_ref[...].astype(jnp.float32)

    @pl.when(i < nblk_g)
    def _eikonal():
        gx = grad_ref[0].astype(jnp.float32)                        # (SUBg,128)
        gy = grad_ref[1].astype(jnp.float32)
        gz = grad_ref[2].astype(jnp.float32)
        # TODO(synk): forward-only; a VJP would need an eps inside the sqrt.
        nrm = jnp.sqrt(gx * gx + gy * gy + gz * gz)
        sub_g, lane = gidx.shape
        bound = m_pts - i * (sub_g * lane)      # valid points left in this block
        acc_eik[...] += jnp.where(gidx[...] < bound, (nrm - 1.0) ** 2, 0.0)

    @pl.when(i == n_steps - 1)
    def _epilogue():
        def _total(acc):
            s = jnp.sum(acc[...], axis=1, keepdims=True)
            return jnp.sum(s, axis=0, keepdims=True)
        rgb_out[...] = _total(acc_rgb)
        bce_out[...] = _total(acc_bce)
        eik_out[...] = _total(acc_eik)


# ---------------------------------------------------------------------------
# Wrapper (mirrors IDRLoss.forward).
# ---------------------------------------------------------------------------
def idr_loss(model_outputs, ground_truth, *, eikonal_weight, mask_weight, alpha):
    rgb_values = model_outputs['rgb_values']             # (N, 3)
    nm = model_outputs['network_object_mask']            # (N,) bool
    om = model_outputs['object_mask']                    # (N,) bool
    sdf_output = model_outputs['sdf_output']             # (N, 1)
    grad_theta = model_outputs['grad_theta']             # (M, 3)
    rgb_gt = ground_truth['rgb'].reshape(-1, 3)          # (N, 3)

    n_pix = int(om.shape[0])
    n_grad = int(grad_theta.shape[0])

    sub_p, nblk_p, n_pad_p = _plan(n_pix)
    sub_g, nblk_g, n_pad_g = _plan(n_grad)
    n_steps = max(nblk_p, nblk_g)

    # ---- pixel streams: natural order, flatten + zero-pad + (rows, 128) ----
    and_m = jnp.logical_and(nm, om)
    rgb_rows = _pad_rows(rgb_values, 3 * n_pad_p)                 # float (3r,128)
    gt_rows = _pad_rows(rgb_gt, 3 * n_pad_p)
    and3_rows = _pad_rows(jnp.repeat(and_m, 3), 3 * n_pad_p, jnp.int8)
    sdf_rows = _pad_rows(sdf_output, n_pad_p)
    om_rows = _pad_rows(om, n_pad_p, jnp.int8)
    bcem_rows = _pad_rows(jnp.logical_not(and_m), n_pad_p, jnp.int8)

    # ---- grad: group the 3 components of each point onto the leading axis --
    g = grad_theta
    if n_pad_g != n_grad:
        g = jnp.pad(g, ((0, n_pad_g - n_grad), (0, 0)))
    grad_g = g.reshape(n_pad_g // _LANE, _LANE, 3).transpose(2, 0, 1)

    alpha_arr = jnp.full((1, 1), alpha, dtype=jnp.float32)

    pix_map = lambda i: (jnp.minimum(i, nblk_p - 1), 0)
    grad_map = lambda i: (0, jnp.minimum(i, nblk_g - 1), 0)
    out_map = lambda i: (0, 0)

    rgb_sum, bce_sum, eik_sum = pl.pallas_call(
        functools.partial(_idr_kernel, nblk_p, nblk_g, n_grad),
        out_shape=(
            jax.ShapeDtypeStruct((1, 1), jnp.float32),
            jax.ShapeDtypeStruct((1, 1), jnp.float32),
            jax.ShapeDtypeStruct((1, 1), jnp.float32),
        ),
        grid=(n_steps,),
        in_specs=[
            pl.BlockSpec(memory_space=pltpu.MemorySpace.SMEM),     # alpha (1,1)
            pl.BlockSpec((3 * sub_p, _LANE), pix_map),             # rgb
            pl.BlockSpec((3 * sub_p, _LANE), pix_map),             # rgb_gt
            pl.BlockSpec((3 * sub_p, _LANE), pix_map),             # repeat(nm&om,3)
            pl.BlockSpec((sub_p, _LANE), pix_map),                 # sdf
            pl.BlockSpec((sub_p, _LANE), pix_map),                 # object_mask
            pl.BlockSpec((sub_p, _LANE), pix_map),                 # ~(nm&om)
            pl.BlockSpec((3, sub_g, _LANE), grad_map),             # grad_theta
        ],
        out_specs=(
            pl.BlockSpec((1, 1), out_map),
            pl.BlockSpec((1, 1), out_map),
            pl.BlockSpec((1, 1), out_map),
        ),
        scratch_shapes=[
            pltpu.VMEM((3 * sub_p, _LANE), jnp.float32),           # rgb acc
            pltpu.VMEM((sub_p, _LANE), jnp.float32),               # bce acc
            pltpu.VMEM((sub_g, _LANE), jnp.float32),               # eik acc
            pltpu.VMEM((sub_g, _LANE), jnp.int32),                 # hoisted iota
        ],
        compiler_params=pltpu.CompilerParams(
            dimension_semantics=("arbitrary",)),
    )(alpha_arr, rgb_rows, gt_rows, and3_rows, sdf_rows, om_rows, bcem_rows,
      grad_g)

    inv_n = 1.0 / float(n_pix)
    rgb_loss = rgb_sum[0, 0] * inv_n
    mask_loss = (1.0 / alpha) * bce_sum[0, 0] * inv_n
    eikonal_loss = eik_sum[0, 0] / float(max(n_grad, 1))
    loss = rgb_loss + eikonal_weight * eikonal_loss + mask_weight * mask_loss
    return {'loss': loss, 'rgb_loss': rgb_loss,
            'eikonal_loss': eikonal_loss, 'mask_loss': mask_loss}


# ---------------------------------------------------------------------------
# Pure-JAX reference mirroring the PyTorch module (self-check).
# ---------------------------------------------------------------------------
def _reference(model_outputs, ground_truth, *, eikonal_weight, mask_weight, alpha):
    rgb_values = model_outputs['rgb_values'].astype(jnp.float32)
    nm = model_outputs['network_object_mask']
    om = model_outputs['object_mask']
    sdf = model_outputs['sdf_output'].astype(jnp.float32)
    grad = model_outputs['grad_theta'].astype(jnp.float32)
    rgb_gt = ground_truth['rgb'].reshape(-1, 3).astype(jnp.float32)
    n = om.shape[0]

    and_m = (nm & om).astype(jnp.float32)[:, None]
    rgb_loss = jnp.sum(jnp.abs(rgb_values - rgb_gt) * and_m) / n

    x = -alpha * sdf[:, 0]
    z = om.astype(jnp.float32)
    bce = jnp.maximum(x, 0.0) - x * z + jnp.log1p(jnp.exp(-jnp.abs(x)))
    mask_loss = (1.0 / alpha) * jnp.sum(bce * (1.0 - and_m[:, 0])) / n

    if grad.shape[0] > 0:
        eik_loss = jnp.mean((jnp.linalg.norm(grad, axis=1) - 1.0) ** 2)
    else:
        eik_loss = jnp.asarray(0.0, jnp.float32)

    loss = rgb_loss + eikonal_weight * eik_loss + mask_weight * mask_loss
    return {'loss': loss, 'rgb_loss': rgb_loss,
            'eikonal_loss': eik_loss, 'mask_loss': mask_loss}


def _make_inputs(key, batch, pixels_per_img, n_grad):
    n_pix = batch * pixels_per_img
    k1, k2, k3, k4, k5, k6 = jax.random.split(key, 6)
    model_outputs = {
        'rgb_values': jax.random.uniform(k1, (n_pix, 3), dtype=jnp.float32),
        'network_object_mask': jax.random.bernoulli(k5, 0.6, (n_pix,)),
        'object_mask': jax.random.bernoulli(k6, 0.6, (n_pix,)),
        'sdf_output': 0.1 * jax.random.normal(k3, (n_pix, 1), dtype=jnp.float32),
        'grad_theta': jax.random.normal(k4, (n_grad, 3), dtype=jnp.float32),
    }
    ground_truth = {
        'rgb': jax.random.uniform(k2, (batch, pixels_per_img, 3),
                                  dtype=jnp.float32),
    }
    return model_outputs, ground_truth


if __name__ == "__main__":
    hparams = dict(eikonal_weight=0.1, mask_weight=100.0, alpha=50.0)
    key = jax.random.PRNGKey(0)
    k_a, k_b = jax.random.split(key)

    # Case 1: small shapes (single block).
    # Case 2: multi-block grid with mismatched pixel/grad block counts
    # (exercises clamped index maps + pl.when guards).
    cases = [
        _make_inputs(k_a, batch=2, pixels_per_img=64, n_grad=64),
        _make_inputs(k_b, batch=2, pixels_per_img=20000, n_grad=1000),
    ]

    for model_outputs, ground_truth in cases:
        out = idr_loss(model_outputs, ground_truth, **hparams)
        out = jax.tree_util.tree_map(jax.block_until_ready, out)
        ref = _reference(model_outputs, ground_truth, **hparams)
        for name in ('loss', 'rgb_loss', 'eikonal_loss', 'mask_loss'):
            assert jnp.allclose(out[name], ref[name], rtol=1e-4, atol=1e-4), (
                name, out[name], ref[name])

    print("KERNEL_OK")
</pallas_src>

<mosaic_0001>
module attributes {stable_mosaic.version = 11 : i64} {
  func.func @_idr_kernel(%arg0: i32, %arg1: memref<1x1xf32, #tpu.memory_space<smem>>, %arg2: memref<96x128xf32, #tpu.memory_space<vmem>>, %arg3: memref<96x128xf32, #tpu.memory_space<vmem>>, %arg4: memref<96x128xi8, #tpu.memory_space<vmem>>, %arg5: memref<32x128xf32, #tpu.memory_space<vmem>>, %arg6: memref<32x128xi8, #tpu.memory_space<vmem>>, %arg7: memref<32x128xi8, #tpu.memory_space<vmem>>, %arg8: memref<3x32x128xf32, #tpu.memory_space<vmem>>, %arg9: memref<1x1xf32, #tpu.memory_space<vmem>>, %arg10: memref<1x1xf32, #tpu.memory_space<vmem>>, %arg11: memref<1x1xf32, #tpu.memory_space<vmem>>, %arg12: memref<96x128xf32, #tpu.memory_space<vmem>>, %arg13: memref<32x128xf32, #tpu.memory_space<vmem>>, %arg14: memref<32x128xf32, #tpu.memory_space<vmem>>, %arg15: memref<32x128xi32, #tpu.memory_space<vmem>>) attributes {dimension_semantics = [#tpu.dimension_semantics<arbitrary>], iteration_bounds = array<i64: 1>, scalar_prefetch = 0 : i64, scratch_operands = 4 : i64, tpu.core_type = #tpu.core_type<tc>, window_params = [{transform_indices = @transform_0, window_bounds = array<i64: 1, 1>}, {transform_indices = @transform_1, window_bounds = array<i64: 96, 128>}, {transform_indices = @transform_2, window_bounds = array<i64: 96, 128>}, {transform_indices = @transform_3, window_bounds = array<i64: 96, 128>}, {transform_indices = @transform_4, window_bounds = array<i64: 32, 128>}, {transform_indices = @transform_5, window_bounds = array<i64: 32, 128>}, {transform_indices = @transform_6, window_bounds = array<i64: 32, 128>}, {transform_indices = @transform_7, window_bounds = array<i64: 3, 32, 128>}, {pipeline_mode = #tpu.pipeline_mode<synchronous>, transform_indices = @transform_8, window_bounds = array<i64: 1, 1>}, {pipeline_mode = #tpu.pipeline_mode<synchronous>, transform_indices = @transform_9, window_bounds = array<i64: 1, 1>}, {pipeline_mode = #tpu.pipeline_mode<synchronous>, transform_indices = @transform_10, window_bounds = array<i64: 1, 1>}]} {
    %c0_i32 = arith.constant 0 : i32
    %0 = arith.cmpi eq, %arg0, %c0_i32 : i32
    %1 = arith.extui %0 : i1 to i32
    %c0_i32_0 = arith.constant 0 : i32
    %2 = arith.cmpi ne, %1, %c0_i32_0 : i32
    scf.if %2 {
      %cst = arith.constant 0.000000e+00 : f32
      %12 = vector.broadcast %cst : f32 to vector<96x128xf32>
      %c0 = arith.constant 0 : index
      %c0_6 = arith.constant 0 : index
      %13 = vector.load %arg12[%c0, %c0_6] : memref<96x128xf32, #tpu.memory_space<vmem>>, vector<96x128xf32>
      tpu.vector_store %arg12[%c0, %c0_6], %12 {strides = array<i32>} : memref<96x128xf32, #tpu.memory_space<vmem>>, vector<96x128xf32>,
      %cst_7 = arith.constant 0.000000e+00 : f32
      %14 = vector.broadcast %cst_7 : f32 to vector<32x128xf32>
      %c0_8 = arith.constant 0 : index
      %c0_9 = arith.constant 0 : index
      %15 = vector.load %arg13[%c0_8, %c0_9] : memref<32x128xf32, #tpu.memory_space<vmem>>, vector<32x128xf32>
      tpu.vector_store %arg13[%c0_8, %c0_9], %14 {strides = array<i32>} : memref<32x128xf32, #tpu.memory_space<vmem>>, vector<32x128xf32>,
      %cst_10 = arith.constant 0.000000e+00 : f32
      %16 = vector.broadcast %cst_10 : f32 to vector<32x128xf32>
      %c0_11 = arith.constant 0 : index
      %c0_12 = arith.constant 0 : index
      %17 = vector.load %arg14[%c0_11, %c0_12] : memref<32x128xf32, #tpu.memory_space<vmem>>, vector<32x128xf32>
      tpu.vector_store %arg14[%c0_11, %c0_12], %16 {strides = array<i32>} : memref<32x128xf32, #tpu.memory_space<vmem>>, vector<32x128xf32>,
      %18 = tpu.iota {dimensions = array<i32: 0>} : vector<32x128xi32>
      %c128_i32 = arith.constant 128 : i32
      %19 = vector.broadcast %c128_i32 : i32 to vector<32x128xi32>
      %20 = arith.muli %18, %19 : vector<32x128xi32>
      %21 = tpu.iota {dimensions = array<i32: 1>} : vector<32x128xi32>
      %22 = arith.addi %20, %21 : vector<32x128xi32>
      %c0_13 = arith.constant 0 : index
      %c0_14 = arith.constant 0 : index
      %23 = vector.load %arg15[%c0_13, %c0_14] : memref<32x128xi32, #tpu.memory_space<vmem>>, vector<32x128xi32>
      tpu.vector_store %arg15[%c0_13, %c0_14], %22 {strides = array<i32>} : memref<32x128xi32, #tpu.memory_space<vmem>>, vector<32x128xi32>,
    } else {
    }
    %c1_i32 = arith.constant 1 : i32
    %3 = arith.cmpi slt, %arg0, %c1_i32 : i32
    %4 = arith.extui %3 : i1 to i32
    %c0_i32_1 = arith.constant 0 : i32
    %5 = arith.cmpi ne, %4, %c0_i32_1 : i32
    scf.if %5 {
      %c0 = arith.constant 0 : index
      %c0_6 = arith.constant 0 : index
      %12 = vector.load %arg2[%c0, %c0_6] : memref<96x128xf32, #tpu.memory_space<vmem>>, vector<96x128xf32>
      %c0_7 = arith.constant 0 : index
      %c0_8 = arith.constant 0 : index
      %13 = vector.load %arg3[%c0_7, %c0_8] : memref<96x128xf32, #tpu.memory_space<vmem>>, vector<96x128xf32>
      %14 = arith.subf %12, %13 : vector<96x128xf32>
      %15 = math.absf %14 : vector<96x128xf32>
      %c0_9 = arith.constant 0 : index
      %c0_10 = arith.constant 0 : index
      %16 = vector.load %arg12[%c0_9, %c0_10] : memref<96x128xf32, #tpu.memory_space<vmem>>, vector<96x128xf32>
      %c0_11 = arith.constant 0 : index
      %c0_12 = arith.constant 0 : index
      %17 = vector.load %arg4[%c0_11, %c0_12] : memref<96x128xi8, #tpu.memory_space<vmem>>, vector<96x128xi8>
      %18 = arith.sitofp %17 : vector<96x128xi8> to vector<96x128xf32>
      %19 = arith.mulf %15, %18 : vector<96x128xf32>
      %20 = arith.addf %16, %19 : vector<96x128xf32>
      %c0_13 = arith.constant 0 : index
      %c0_14 = arith.constant 0 : index
      %21 = vector.load %arg12[%c0_13, %c0_14] : memref<96x128xf32, #tpu.memory_space<vmem>>, vector<96x128xf32>
      tpu.vector_store %arg12[%c0_13, %c0_14], %20 {strides = array<i32>} : memref<96x128xf32, #tpu.memory_space<vmem>>, vector<96x128xf32>,
      %c0_15 = arith.constant 0 : index
      %c0_16 = arith.constant 0 : index
      %22 = memref.load %arg1[%c0_15, %c0_16] : memref<1x1xf32, #tpu.memory_space<smem>>
      %cst = arith.constant 0.000000e+00 : f32
      %23 = arith.subf %cst, %22 : f32
      %c0_17 = arith.constant 0 : index
      %c0_18 = arith.constant 0 : index
      %24 = vector.load %arg5[%c0_17, %c0_18] : memref<32x128xf32, #tpu.memory_space<vmem>>, vector<32x128xf32>
      %25 = vector.broadcast %23 : f32 to vector<32x128xf32>
      %26 = arith.mulf %25, %24 : vector<32x128xf32>
      %c0_19 = arith.constant 0 : index
      %c0_20 = arith.constant 0 : index
      %27 = vector.load %arg6[%c0_19, %c0_20] : memref<32x128xi8, #tpu.memory_space<vmem>>, vector<32x128xi8>
      %28 = arith.sitofp %27 : vector<32x128xi8> to vector<32x128xf32>
      %cst_21 = arith.constant 0.000000e+00 : f32
      %29 = vector.broadcast %cst_21 : f32 to vector<32x128xf32>
      %30 = arith.maximumf %26, %29 : vector<32x128xf32>
      %31 = arith.mulf %26, %28 : vector<32x128xf32>
      %32 = arith.subf %30, %31 : vector<32x128xf32>
      %33 = math.absf %26 : vector<32x128xf32>
      %cst_22 = arith.constant 0.000000e+00 : f32
      %34 = vector.broadcast %cst_22 : f32 to vector<32x128xf32>
      %35 = arith.subf %34, %33 : vector<32x128xf32>
      %36 = math.exp %35 : vector<32x128xf32>
      %37 = math.log1p %36 : vector<32x128xf32>
      %38 = arith.addf %32, %37 : vector<32x128xf32>
      %c0_23 = arith.constant 0 : index
      %c0_24 = arith.constant 0 : index
      %39 = vector.load %arg13[%c0_23, %c0_24] : memref<32x128xf32, #tpu.memory_space<vmem>>, vector<32x128xf32>
      %c0_25 = arith.constant 0 : index
      %c0_26 = arith.constant 0 : index
      %40 = vector.load %arg7[%c0_25, %c0_26] : memref<32x128xi8, #tpu.memory_space<vmem>>, vector<32x128xi8>
      %41 = arith.sitofp %40 : vector<32x128xi8> to vector<32x128xf32>
      %42 = arith.mulf %38, %41 : vector<32x128xf32>
      %43 = arith.addf %39, %42 : vector<32x128xf32>
      %c0_27 = arith.constant 0 : index
      %c0_28 = arith.constant 0 : index
      %44 = vector.load %arg13[%c0_27, %c0_28] : memref<32x128xf32, #tpu.memory_space<vmem>>, vector<32x128xf32>
      tpu.vector_store %arg13[%c0_27, %c0_28], %43 {strides = array<i32>} : memref<32x128xf32, #tpu.memory_space<vmem>>, vector<32x128xf32>,
    } else {
    }
    %c1_i32_2 = arith.constant 1 : i32
    %6 = arith.cmpi slt, %arg0, %c1_i32_2 : i32
    %7 = arith.extui %6 : i1 to i32
    %c0_i32_3 = arith.constant 0 : i32
    %8 = arith.cmpi ne, %7, %c0_i32_3 : i32
    scf.if %8 {
      %c0 = arith.constant 0 : index
      %c0_6 = arith.constant 0 : index
      %c0_7 = arith.constant 0 : index
      %12 = vector.load %arg8[%c0, %c0_6, %c0_7] : memref<3x32x128xf32, #tpu.memory_space<vmem>>, vector<1x32x128xf32>
      %13 = vector.shape_cast %12 : vector<1x32x128xf32> to vector<32x128xf32>
      %c1 = arith.constant 1 : index
      %c0_8 = arith.constant 0 : index
      %c0_9 = arith.constant 0 : index
      %14 = vector.load %arg8[%c1, %c0_8, %c0_9] : memref<3x32x128xf32, #tpu.memory_space<vmem>>, vector<1x32x128xf32>
      %15 = vector.shape_cast %14 : vector<1x32x128xf32> to vector<32x128xf32>
      %c2 = arith.constant 2 : index
      %c0_10 = arith.constant 0 : index
      %c0_11 = arith.constant 0 : index
      %16 = vector.load %arg8[%c2, %c0_10, %c0_11] : memref<3x32x128xf32, #tpu.memory_space<vmem>>, vector<1x32x128xf32>
      %17 = vector.shape_cast %16 : vector<1x32x128xf32> to vector<32x128xf32>
      %18 = arith.mulf %13, %13 : vector<32x128xf32>
      %19 = arith.mulf %15, %15 : vector<32x128xf32>
      %20 = arith.addf %18, %19 : vector<32x128xf32>
      %21 = arith.mulf %17, %17 : vector<32x128xf32>
      %22 = arith.addf %20, %21 : vector<32x128xf32>
      %23 = math.sqrt %22 : vector<32x128xf32>
      %c4096_i32 = arith.constant 4096 : i32
      %24 = arith.muli %arg0, %c4096_i32 : i32
      %c64_i32 = arith.constant 64 : i32
      %25 = arith.subi %c64_i32, %24 : i32
      %c0_12 = arith.constant 0 : index
      %c0_13 = arith.constant 0 : index
      %26 = vector.load %arg14[%c0_12, %c0_13] : memref<32x128xf32, #tpu.memory_space<vmem>>, vector<32x128xf32>
      %c0_14 = arith.constant 0 : index
      %c0_15 = arith.constant 0 : index
      %27 = vector.load %arg15[%c0_14, %c0_15] : memref<32x128xi32, #tpu.memory_space<vmem>>, vector<32x128xi32>
      %28 = vector.broadcast %25 : i32 to vector<32x128xi32>
      %29 = arith.cmpi slt, %27, %28 : vector<32x128xi32>
      %cst = arith.constant 1.000000e+00 : f32
      %30 = vector.broadcast %cst : f32 to vector<32x128xf32>
      %31 = arith.subf %23, %30 : vector<32x128xf32>
      %32 = arith.mulf %31, %31 : vector<32x128xf32>
      %cst_16 = arith.constant 0.000000e+00 : f32
      %33 = vector.broadcast %cst_16 : f32 to vector<32x128xf32>
      %34 = arith.select %29, %32, %33 : vector<32x128xi1>, vector<32x128xf32>
      %35 = arith.addf %26, %34 : vector<32x128xf32>
      %c0_17 = arith.constant 0 : index
      %c0_18 = arith.constant 0 : index
      %36 = vector.load %arg14[%c0_17, %c0_18] : memref<32x128xf32, #tpu.memory_space<vmem>>, vector<32x128xf32>
      tpu.vector_store %arg14[%c0_17, %c0_18], %35 {strides = array<i32>} : memref<32x128xf32, #tpu.memory_space<vmem>>, vector<32x128xf32>,
    } else {
    }
    %c0_i32_4 = arith.constant 0 : i32
    %9 = arith.cmpi eq, %arg0, %c0_i32_4 : i32
    %10 = arith.extui %9 : i1 to i32
    %c0_i32_5 = arith.constant 0 : i32
    %11 = arith.cmpi ne, %10, %c0_i32_5 : i32
    scf.if %11 {
      %c0 = arith.constant 0 : index
      %c0_6 = arith.constant 0 : index
      %12 = vector.load %arg12[%c0, %c0_6] : memref<96x128xf32, #tpu.memory_space<vmem>>, vector<96x128xf32>
      %cst = arith.constant dense<0.000000e+00> : vector<96xf32>
      %13 = vector.multi_reduction <add>, %12, %cst [1] : vector<96x128xf32> to vector<96xf32>
      %14 = vector.shape_cast %13 : vector<96xf32> to vector<96x1xf32>
      %cst_7 = arith.constant dense<0.000000e+00> : vector<1xf32>
      %15 = vector.multi_reduction <add>, %14, %cst_7 [0] : vector<96x1xf32> to vector<1xf32>
      %16 = vector.shape_cast %15 : vector<1xf32> to vector<1x1xf32>
      %c0_8 = arith.constant 0 : index
      %c0_9 = arith.constant 0 : index
      %17 = vector.load %arg9[%c0_8, %c0_9] : memref<1x1xf32, #tpu.memory_space<vmem>>, vector<1x1xf32>
      tpu.vector_store %arg9[%c0_8, %c0_9], %16 {strides = array<i32>} : memref<1x1xf32, #tpu.memory_space<vmem>>, vector<1x1xf32>,
      %c0_10 = arith.constant 0 : index
      %c0_11 = arith.constant 0 : index
      %18 = vector.load %arg13[%c0_10, %c0_11] : memref<32x128xf32, #tpu.memory_space<vmem>>, vector<32x128xf32>
      %cst_12 = arith.constant dense<0.000000e+00> : vector<32xf32>
      %19 = vector.multi_reduction <add>, %18, %cst_12 [1] : vector<32x128xf32> to vector<32xf32>
      %20 = vector.shape_cast %19 : vector<32xf32> to vector<32x1xf32>
      %cst_13 = arith.constant dense<0.000000e+00> : vector<1xf32>
      %21 = vector.multi_reduction <add>, %20, %cst_13 [0] : vector<32x1xf32> to vector<1xf32>
      %22 = vector.shape_cast %21 : vector<1xf32> to vector<1x1xf32>
      %c0_14 = arith.constant 0 : index
      %c0_15 = arith.constant 0 : index
      %23 = vector.load %arg10[%c0_14, %c0_15] : memref<1x1xf32, #tpu.memory_space<vmem>>, vector<1x1xf32>
      tpu.vector_store %arg10[%c0_14, %c0_15], %22 {strides = array<i32>} : memref<1x1xf32, #tpu.memory_space<vmem>>, vector<1x1xf32>,
      %c0_16 = arith.constant 0 : index
      %c0_17 = arith.constant 0 : index
      %24 = vector.load %arg14[%c0_16, %c0_17] : memref<32x128xf32, #tpu.memory_space<vmem>>, vector<32x128xf32>
      %cst_18 = arith.constant dense<0.000000e+00> : vector<32xf32>
      %25 = vector.multi_reduction <add>, %24, %cst_18 [1] : vector<32x128xf32> to vector<32xf32>
      %26 = vector.shape_cast %25 : vector<32xf32> to vector<32x1xf32>
      %cst_19 = arith.constant dense<0.000000e+00> : vector<1xf32>
      %27 = vector.multi_reduction <add>, %26, %cst_19 [0] : vector<32x1xf32> to vector<1xf32>
      %28 = vector.shape_cast %27 : vector<1xf32> to vector<1x1xf32>
      %c0_20 = arith.constant 0 : index
      %c0_21 = arith.constant 0 : index
      %29 = vector.load %arg11[%c0_20, %c0_21] : memref<1x1xf32, #tpu.memory_space<vmem>>, vector<1x1xf32>
      tpu.vector_store %arg11[%c0_20, %c0_21], %28 {strides = array<i32>} : memref<1x1xf32, #tpu.memory_space<vmem>>, vector<1x1xf32>,
    } else {
    }
    return
  }
  func.func @transform_0(%arg0: i32) -> (i32, i32) {
    %c0_i32 = arith.constant 0 : i32
    %c0_i32_0 = arith.constant 0 : i32
    %c0_i32_1 = arith.constant 0 : i32
    return %c0_i32, %c0_i32_0 : i32, i32
  }
  func.func @transform_1(%arg0: i32) -> (i32, i32) {
    %c0_i32 = arith.constant 0 : i32
    %0 = arith.minsi %arg0, %c0_i32 : i32
    %c0_i32_0 = arith.constant 0 : i32
    %c0_i32_1 = arith.constant 0 : i32
    return %0, %c0_i32_0 : i32, i32
  }
  func.func @transform_2(%arg0: i32) -> (i32, i32) {
    %c0_i32 = arith.constant 0 : i32
    %0 = arith.minsi %arg0, %c0_i32 : i32
    %c0_i32_0 = arith.constant 0 : i32
    %c0_i32_1 = arith.constant 0 : i32
    return %0, %c0_i32_0 : i32, i32
  }
  func.func @transform_3(%arg0: i32) -> (i32, i32) {
    %c0_i32 = arith.constant 0 : i32
    %0 = arith.minsi %arg0, %c0_i32 : i32
    %c0_i32_0 = arith.constant 0 : i32
    %c0_i32_1 = arith.constant 0 : i32
    return %0, %c0_i32_0 : i32, i32
  }
  func.func @transform_4(%arg0: i32) -> (i32, i32) {
    %c0_i32 = arith.constant 0 : i32
    %0 = arith.minsi %arg0, %c0_i32 : i32
    %c0_i32_0 = arith.constant 0 : i32
    %c0_i32_1 = arith.constant 0 : i32
    return %0, %c0_i32_0 : i32, i32
  }
  func.func @transform_5(%arg0: i32) -> (i32, i32) {
    %c0_i32 = arith.constant 0 : i32
    %0 = arith.minsi %arg0, %c0_i32 : i32
    %c0_i32_0 = arith.constant 0 : i32
    %c0_i32_1 = arith.constant 0 : i32
    return %0, %c0_i32_0 : i32, i32
  }
  func.func @transform_6(%arg0: i32) -> (i32, i32) {
    %c0_i32 = arith.constant 0 : i32
    %0 = arith.minsi %arg0, %c0_i32 : i32
    %c0_i32_0 = arith.constant 0 : i32
    %c0_i32_1 = arith.constant 0 : i32
    return %0, %c0_i32_0 : i32, i32
  }
  func.func @transform_7(%arg0: i32) -> (i32, i32, i32) {
    %c0_i32 = arith.constant 0 : i32
    %0 = arith.minsi %arg0, %c0_i32 : i32
    %c0_i32_0 = arith.constant 0 : i32
    %c0_i32_1 = arith.constant 0 : i32
    %c0_i32_2 = arith.constant 0 : i32
    return %c0_i32_0, %0, %c0_i32_1 : i32, i32, i32
  }
  func.func @transform_8(%arg0: i32) -> (i32, i32) {
    %c0_i32 = arith.constant 0 : i32
    %c0_i32_0 = arith.constant 0 : i32
    %c0_i32_1 = arith.constant 0 : i32
    return %c0_i32, %c0_i32_0 : i32, i32
  }
  func.func @transform_9(%arg0: i32) -> (i32, i32) {
    %c0_i32 = arith.constant 0 : i32
    %c0_i32_0 = arith.constant 0 : i32
    %c0_i32_1 = arith.constant 0 : i32
    return %c0_i32, %c0_i32_0 : i32, i32
  }
  func.func @transform_10(%arg0: i32) -> (i32, i32) {
    %c0_i32 = arith.constant 0 : i32
    %c0_i32_0 = arith.constant 0 : i32
    %c0_i32_1 = arith.constant 0 : i32
    return %c0_i32, %c0_i32_0 : i32, i32
  }
}

</mosaic_0001>

<llo_original>
// kernel: tpu_custom_call.1
$region0: #{tpu_custom_call.1}
  #allocation0 [shape = 'u32[]', space=smem, size = 0x4, offset = 0x4, fixed_abs, tag = 'smem constant byte address 0x4 - core index']
  #allocation1 [shape = 'u32[144,128]{1,0:T(1,128)}', space=vmem, size = 0x12000, scoped, tag = 'internal scratch']
  #allocation2 [shape = 'f32[96,128]{1,0:T(8,128)}', space=vmem, size = 0xc000, scoped, tag = 'scratch operand']
  #allocation3 [shape = 'f32[32,128]{1,0:T(8,128)}', space=vmem, size = 0x4000, scoped, tag = 'scratch operand']
  #allocation4 [shape = 'f32[32,128]{1,0:T(8,128)}', space=vmem, size = 0x4000, scoped, tag = 'scratch operand']
  #allocation5 [shape = 's32[32,128]{1,0:T(8,128)}', space=vmem, size = 0x4000, scoped, tag = 'scratch operand']
  #allocation6 [shape = 'f32[1,1]{1,0:T(1,128)S(6)}', space=smem, size = 0x200, scoped, tag = 'scoped memory for tpu_custom_call.1']
  %s0 = inlined_call_operand.<no memory space> [shape: f32[1,1], index: 0, kind: input, shape index: {}]
  %s1 = inlined_call_operand.hbm [shape: f32[96,128], index: 1, kind: input, shape index: {}]
  %s2 = inlined_call_operand.hbm [shape: f32[96,128], index: 2, kind: input, shape index: {}]
  %s3 = inlined_call_operand.hbm [shape: s8[96,128], index: 3, kind: input, shape index: {}]
  %s4 = inlined_call_operand.hbm [shape: f32[32,128], index: 4, kind: input, shape index: {}]
  %s5 = inlined_call_operand.vmem [shape: s8[32,128], index: 5, kind: input, shape index: {}]
  %s6 = inlined_call_operand.vmem [shape: s8[32,128], index: 6, kind: input, shape index: {}]
  %s7 = inlined_call_operand.hbm [shape: f32[3,32,128], index: 7, kind: input, shape index: {}]
  %s8 = inlined_call_operand.hbm [shape: f32[1,1], index: 8, kind: output, shape index: {0}]
  %s9 = inlined_call_operand.hbm [shape: f32[1,1], index: 9, kind: output, shape index: {1}]
  %s10 = inlined_call_operand.hbm [shape: f32[1,1], index: 10, kind: output, shape index: {2}]
  %11 = xla_tuple %s8, %s9, %s10
  %s12 = sld [smem:[#allocation0]]
  $region90: #{tpu_custom_call.1} parent=0
    _
  %s14 = ssub.s32 1, %s12
  %s15 = scalar_select 0, %s14, %s12
  %16 = sst [smem:[#allocation6]] %s0
  $region1: #{tpu_custom_call.1} parent=0
    #allocation7 [shape = 'u8[49152]{0}', space=vmem, size = 0xc000, scoped, tag = 'input window, operand 1, single buffered']
    #allocation8 [shape = 's32[1]{0}', space=sflag, size = 0x4, scoped, tag = 'scoped memory for tpu_custom_call.1']
    #allocation9 [shape = 's32[1]{0}', space=sflag, size = 0x4, scoped, tag = 'scoped memory for tpu_custom_call.1']
    #allocation10 [shape = 'u8[49152]{0}', space=vmem, size = 0xc000, scoped, tag = 'input window, operand 2, single buffered']
    #allocation11 [shape = 's32[1]{0}', space=sflag, size = 0x4, scoped, tag = 'scoped memory for tpu_custom_call.1']
    #allocation12 [shape = 'u8[12288]{0}', space=vmem, size = 0x3000, scoped, tag = 'input window, operand 3, single buffered']
    #allocation13 [shape = 'u8[16384]{0}', space=vmem, size = 0x4000, scoped, tag = 'input window, operand 4, single buffered']
    #allocation14 [shape = 's32[1]{0}', space=sflag, size = 0x4, scoped, tag = 'scoped memory for tpu_custom_call.1']
    #allocation15 [shape = 'u8[49152]{0}', space=vmem, size = 0xc000, scoped, tag = 'input window, operand 7, single buffered']
    #allocation16 [shape = 'u8[512]{0}', space=vmem, size = 0x400, scoped, tag = 'output window, operand 0, single buffered']
    #allocation17 [shape = 'u8[512]{0}', space=vmem, size = 0x400, scoped, tag = 'output window, operand 1, single buffered']
    #allocation18 [shape = 's32[1]{0}', space=sflag, size = 0x4, scoped, tag = 'scoped memory for tpu_custom_call.1']
    #allocation19 [shape = 'u8[512]{0}', space=vmem, size = 0x400, scoped, tag = 'output window, operand 2, single buffered']
    %17 = vsyncpa [#allocation8], 0
    %18 = vsyncpa [#allocation11], 0
    %19 = vsyncpa [#allocation14], 0
    %20 = vsyncpa [#allocation9], 0
    %21 = vsyncpa [#allocation18], 0
    // Predicated region
    $region2: #{tpu_custom_call.1} parent=1 // pred_check
      _
    $region3: #{tpu_custom_call.1} parent=1 // pred_check_branch
      %23 = sbr.rel (0) target = $region5
    $region4: #{tpu_custom_call.1} parent=1 // pred_region
      _
    $region5: #{tpu_custom_call.1} parent=1 // pred_fallthru
      _
    // Predicated region
    $region6: #{tpu_custom_call.1} parent=1 // pred_check
      _
    $region7: #{tpu_custom_call.1} parent=1 // pred_check_branch
      %25 = sbr.rel (0) target = $region9
    $region8: #{tpu_custom_call.1} parent=1 // pred_region
      %s27 = ssub.s32 1536, 1536
      %28 = vsyncadd [#allocation8], %s27
      %s29 = sshll.u32 [#allocation7], 4
      %s30 = int_to_ptr.vmem [resolvable:$true] %s29
      %35 = dma.hbm_to_vmem [thread:$0]  %s1, 1536, %s30, [#allocation8], 128, 128, 8
    $region9: #{tpu_custom_call.1} parent=1 // pred_fallthru
      _
    // Predicated region
    $region10: #{tpu_custom_call.1} parent=1 // pred_check
      _
    $region11: #{tpu_custom_call.1} parent=1 // pred_check_branch
      %37 = sbr.rel (0) target = $region13
    $region12: #{tpu_custom_call.1} parent=1 // pred_region
      %s39 = ssub.s32 1536, 1536
      %40 = vsyncadd [#allocation11], %s39
      %s41 = sshll.u32 [#allocation10], 4
      %s42 = int_to_ptr.vmem [resolvable:$true] %s41
      %47 = dma.hbm_to_vmem [thread:$0]  %s2, 1536, %s42, [#allocation11], 128, 128, 8
    $region13: #{tpu_custom_call.1} parent=1 // pred_fallthru
      _
    // Predicated region
    $region14: #{tpu_custom_call.1} parent=1 // pred_check
      _
    $region15: #{tpu_custom_call.1} parent=1 // pred_check_branch
      %49 = sbr.rel (0) target = $region17
    $region16: #{tpu_custom_call.1} parent=1 // pred_region
      %s51 = ssub.s32 384, 384
      %52 = vsyncadd [#allocation11], %s51
      %s53 = sshll.u32 [#allocation12], 4
      %s54 = int_to_ptr.vmem [resolvable:$true] %s53
      %59 = dma.hbm_to_vmem [thread:$0]  %s3, 384, %s54, [#allocation11], 128, 128, 8
    $region17: #{tpu_custom_call.1} parent=1 // pred_fallthru
      _
    // Predicated region
    $region18: #{tpu_custom_call.1} parent=1 // pred_check
      _
    $region19: #{tpu_custom_call.1} parent=1 // pred_check_branch
      %61 = sbr.rel (0) target = $region21
    $region20: #{tpu_custom_call.1} parent=1 // pred_region
      %s63 = ssub.s32 512, 512
      %64 = vsyncadd [#allocation14], %s63
      %s65 = sshll.u32 [#allocation13], 4
      %s66 = int_to_ptr.vmem [resolvable:$true] %s65
      %71 = dma.hbm_to_vmem [thread:$0]  %s4, 512, %s66, [#allocation14], 128, 128, 8
    $region21: #{tpu_custom_call.1} parent=1 // pred_fallthru
      _
    // Predicated region
    $region22: #{tpu_custom_call.1} parent=1 // pred_check
      _
    $region23: #{tpu_custom_call.1} parent=1 // pred_check_branch
      %73 = sbr.rel (0) target = $region25
    $region24: #{tpu_custom_call.1} parent=1 // pred_region
      _
    $region25: #{tpu_custom_call.1} parent=1 // pred_fallthru
      _
    // Predicated region
    $region26: #{tpu_custom_call.1} parent=1 // pred_check
      _
    $region27: #{tpu_custom_call.1} parent=1 // pred_check_branch
      %75 = sbr.rel (0) target = $region29
    $region28: #{tpu_custom_call.1} parent=1 // pred_region
      _
    $region29: #{tpu_custom_call.1} parent=1 // pred_fallthru
      _
    // Predicated region
    $region30: #{tpu_custom_call.1} parent=1 // pred_check
      _
    $region31: #{tpu_custom_call.1} parent=1 // pred_check_branch
      %77 = sbr.rel (0) target = $region33
    $region32: #{tpu_custom_call.1} parent=1 // pred_region
      %s79 = ssub.s32 1536, 1536
      %80 = vsyncadd [#allocation14], %s79
      %s81 = sshll.u32 [#allocation15], 4
      %s82 = int_to_ptr.vmem [resolvable:$true] %s81
      %87 = dma.hbm_to_vmem [thread:$0]  %s7, 1536, %s82, [#allocation14], 128, 128, 8
    $region33: #{tpu_custom_call.1} parent=1 // pred_fallthru
      _
    // Predicated region
    $region34: #{tpu_custom_call.1} parent=1 // pred_check
      _
    $region35: #{tpu_custom_call.1} parent=1 // pred_check_branch
      %89 = sbr.rel (0) target = $region37
    $region36: #{tpu_custom_call.1} parent=1 // pred_region
      %90 = dma.done [#allocation8], 1536
    $region37: #{tpu_custom_call.1} parent=1 // pred_fallthru
      _
    // Predicated region
    $region38: #{tpu_custom_call.1} parent=1 // pred_check
      _
    $region39: #{tpu_custom_call.1} parent=1 // pred_check_branch
      %92 = sbr.rel (0) target = $region41
    $region40: #{tpu_custom_call.1} parent=1 // pred_region
      %93 = dma.done [#allocation11], 1536
    $region41: #{tpu_custom_call.1} parent=1 // pred_fallthru
      _
    // Predicated region
    $region42: #{tpu_custom_call.1} parent=1 // pred_check
      _
    $region43: #{tpu_custom_call.1} parent=1 // pred_check_branch
      %95 = sbr.rel (0) target = $region45
    $region44: #{tpu_custom_call.1} parent=1 // pred_region
      %96 = dma.done [#allocation11], 384
    $region45: #{tpu_custom_call.1} parent=1 // pred_fallthru
      _
    // Predicated region
    $region46: #{tpu_custom_call.1} parent=1 // pred_check
      _
    $region47: #{tpu_custom_call.1} parent=1 // pred_check_branch
      %98 = sbr.rel (0) target = $region49
    $region48: #{tpu_custom_call.1} parent=1 // pred_region
      %99 = dma.done [#allocation14], 512
    $region49: #{tpu_custom_call.1} parent=1 // pred_fallthru
      _
    // Predicated region
    $region50: #{tpu_custom_call.1} parent=1 // pred_check
      _
    $region51: #{tpu_custom_call.1} parent=1 // pred_check_branch
      %101 = sbr.rel (0) target = $region53
    $region52: #{tpu_custom_call.1} parent=1 // pred_region
      %102 = dma.done [#allocation14], 1536
    $region53: #{tpu_custom_call.1} parent=1 // pred_fallthru
      _
    %p103 = scmp.eq.s32.totalorder 0, 0
    // Predicated region
    $region54: #{tpu_custom_call.1} parent=1 // pred_check
      %p104 = pneg %p103
    $region55: #{tpu_custom_call.1} parent=1 // pred_check_branch
      %106 = sbr.rel (%p104) target = $region57
    $region56: #{tpu_custom_call.1} parent=1 // pred_region
      %107 = vst [vmem:[#allocation2] sm:$0xff] 0.0
      %108 = vst [vmem:[#allocation2 + $0x8] sm:$0xff] 0.0
      %109 = vst [vmem:[#allocation2 + $0x10] sm:$0xff] 0.0
      %110 = vst [vmem:[#allocation2 + $0x18] sm:$0xff] 0.0
      %111 = vst [vmem:[#allocation2 + $0x20] sm:$0xff] 0.0
      %112 = vst [vmem:[#allocation2 + $0x28] sm:$0xff] 0.0
      %113 = vst [vmem:[#allocation2 + $0x30] sm:$0xff] 0.0
      %114 = vst [vmem:[#allocation2 + $0x38] sm:$0xff] 0.0
      %115 = vst [vmem:[#allocation2 + $0x40] sm:$0xff] 0.0
      %116 = vst [vmem:[#allocation2 + $0x48] sm:$0xff] 0.0
      %117 = vst [vmem:[#allocation2 + $0x50] sm:$0xff] 0.0
      %118 = vst [vmem:[#allocation2 + $0x58] sm:$0xff] 0.0
      %119 = vst [vmem:[#allocation3] sm:$0xff] 0.0
      %120 = vst [vmem:[#allocation3 + $0x8] sm:$0xff] 0.0
      %121 = vst [vmem:[#allocation3 + $0x10] sm:$0xff] 0.0
      %122 = vst [vmem:[#allocation3 + $0x18] sm:$0xff] 0.0
      %123 = vst [vmem:[#allocation4] sm:$0xff] 0.0
      %124 = vst [vmem:[#allocation4 + $0x8] sm:$0xff] 0.0
      %125 = vst [vmem:[#allocation4 + $0x10] sm:$0xff] 0.0
      %126 = vst [vmem:[#allocation4 + $0x18] sm:$0xff] 0.0
      %v127 = vlaneseq
      %v128 = vshrl.u32 %v127, 7
      %v129 = vadd.s32 %v128, 8
      %v130 = vadd.s32 %v128, 16
      %v131 = vadd.s32 %v128, 24
      %v132 = vmul.u32 %v128, 128
      %v133 = vmul.u32 %v129, 128
      %v134 = vmul.u32 %v130, 128
      %v135 = vmul.u32 %v131, 128
      %v136 = vlaneseq
      %v137 = vand.u32 %v136, 127
      %v138 = vadd.s32 %v132, %v137
      %v139 = vadd.s32 %v133, %v137
      %v140 = vadd.s32 %v134, %v137
      %v141 = vadd.s32 %v135, %v137
      %142 = vst [vmem:[#allocation5] sm:$0xff] %v138
      %143 = vst [vmem:[#allocation5 + $0x8] sm:$0xff] %v139
      %144 = vst [vmem:[#allocation5 + $0x10] sm:$0xff] %v140
      %145 = vst [vmem:[#allocation5 + $0x18] sm:$0xff] %v141
    $region57: #{tpu_custom_call.1} parent=1 // pred_fallthru
      _
    %p146 = scmp.lt.s32.totalorder 0, 1
    // Predicated region
    $region58: #{tpu_custom_call.1} parent=1 // pred_check
      %p147 = pneg %p146
    $region59: #{tpu_custom_call.1} parent=1 // pred_check_branch
      %149 = sbr.rel (%p147) target = $region61
    $region60: #{tpu_custom_call.1} parent=1 // pred_region
      %v150 = vld [vmem:[#allocation7] sm:$0xff]
      %v151 = vld [vmem:[#allocation7 + $0x8] sm:$0xff]
      %v152 = vld [vmem:[#allocation7 + $0x10] sm:$0xff]
      %v153 = vld [vmem:[#allocation7 + $0x18] sm:$0xff]
      %v154 = vld [vmem:[#allocation7 + $0x20] sm:$0xff]
      %v155 = vld [vmem:[#allocation7 + $0x28] sm:$0xff]
      %v156 = vld [vmem:[#allocation7 + $0x30] sm:$0xff]
      %v157 = vld [vmem:[#allocation7 + $0x38] sm:$0xff]
      %v158 = vld [vmem:[#allocation7 + $0x40] sm:$0xff]
      %v159 = vld [vmem:[#allocation7 + $0x48] sm:$0xff]
      %v160 = vld [vmem:[#allocation7 + $0x50] sm:$0xff]
      %v161 = vld [vmem:[#allocation7 + $0x58] sm:$0xff]
      %v162 = vld [vmem:[#allocation10] sm:$0xff]
      %v163 = vld [vmem:[#allocation10 + $0x8] sm:$0xff]
      %v164 = vld [vmem:[#allocation10 + $0x10] sm:$0xff]
      %v165 = vld [vmem:[#allocation10 + $0x18] sm:$0xff]
      %v166 = vld [vmem:[#allocation10 + $0x20] sm:$0xff]
      %v167 = vld [vmem:[#allocation10 + $0x28] sm:$0xff]
      %v168 = vld [vmem:[#allocation10 + $0x30] sm:$0xff]
      %v169 = vld [vmem:[#allocation10 + $0x38] sm:$0xff]
      %v170 = vld [vmem:[#allocation10 + $0x40] sm:$0xff]
      %v171 = vld [vmem:[#allocation10 + $0x48] sm:$0xff]
      %v172 = vld [vmem:[#allocation10 + $0x50] sm:$0xff]
      %v173 = vld [vmem:[#allocation10 + $0x58] sm:$0xff]
      %v174 = vsub.f32 %v150, %v162
      %v175 = vsub.f32 %v151, %v163
      %v176 = vsub.f32 %v152, %v164
      %v177 = vsub.f32 %v153, %v165
      %v178 = vsub.f32 %v154, %v166
      %v179 = vsub.f32 %v155, %v167
      %v180 = vsub.f32 %v156, %v168
      %v181 = vsub.f32 %v157, %v169
      %v182 = vsub.f32 %v158, %v170
      %v183 = vsub.f32 %v159, %v171
      %v184 = vsub.f32 %v160, %v172
      %v185 = vsub.f32 %v161, %v173
      %v186 = vand.u32 2147483647, %v174
      %v187 = vand.u32 2147483647, %v175
      %v188 = vand.u32 2147483647, %v176
      %v189 = vand.u32 2147483647, %v177
      %v190 = vand.u32 2147483647, %v178
      %v191 = vand.u32 2147483647, %v179
      %v192 = vand.u32 2147483647, %v180
      %v193 = vand.u32 2147483647, %v181
      %v194 = vand.u32 2147483647, %v182
      %v195 = vand.u32 2147483647, %v183
      %v196 = vand.u32 2147483647, %v184
      %v197 = vand.u32 2147483647, %v185
      %v198 = vld [vmem:[#allocation2] sm:$0xff]
      %v199 = vld [vmem:[#allocation2 + $0x8] sm:$0xff]
      %v200 = vld [vmem:[#allocation2 + $0x10] sm:$0xff]
      %v201 = vld [vmem:[#allocation2 + $0x18] sm:$0xff]
      %v202 = vld [vmem:[#allocation2 + $0x20] sm:$0xff]
      %v203 = vld [vmem:[#allocation2 + $0x28] sm:$0xff]
      %v204 = vld [vmem:[#allocation2 + $0x30] sm:$0xff]
      %v205 = vld [vmem:[#allocation2 + $0x38] sm:$0xff]
      %v206 = vld [vmem:[#allocation2 + $0x40] sm:$0xff]
      %v207 = vld [vmem:[#allocation2 + $0x48] sm:$0xff]
      %v208 = vld [vmem:[#allocation2 + $0x50] sm:$0xff]
      %v209 = vld [vmem:[#allocation2 + $0x58] sm:$0xff]
      %v210 = vld [vmem:[#allocation12] sm:$0xff]
      %v211 = vld [vmem:[#allocation12 + $0x8] sm:$0xff]
      %v212 = vld [vmem:[#allocation12 + $0x10] sm:$0xff]
      %v213 = vunpack.c.0.s8 %v210
      %v214 = vunpack.c.1.s8 %v210
      %v215 = vunpack.c.2.s8 %v210
      %v216 = vunpack.c.3.s8 %v210
      %v217 = vunpack.c.0.s8 %v211
      %v218 = vunpack.c.1.s8 %v211
      %v219 = vunpack.c.2.s8 %v211
      %v220 = vunpack.c.3.s8 %v211
      %v221 = vunpack.c.0.s8 %v212
      %v222 = vunpack.c.1.s8 %v212
      %v223 = vunpack.c.2.s8 %v212
      %v224 = vunpack.c.3.s8 %v212
      %v225 = vcvt.s32.f32 %v213
      %v226 = vcvt.s32.f32 %v214
      %v227 = vcvt.s32.f32 %v215
      %v228 = vcvt.s32.f32 %v216
      %v229 = vcvt.s32.f32 %v217
      %v230 = vcvt.s32.f32 %v218
      %v231 = vcvt.s32.f32 %v219
      %v232 = vcvt.s32.f32 %v220
      %v233 = vcvt.s32.f32 %v221
      %v234 = vcvt.s32.f32 %v222
      %v235 = vcvt.s32.f32 %v223
      %v236 = vcvt.s32.f32 %v224
      %v237 = vmul.f32 %v186, %v225
      %v238 = vmul.f32 %v187, %v226
      %v239 = vmul.f32 %v188, %v227
      %v240 = vmul.f32 %v189, %v228
      %v241 = vmul.f32 %v190, %v229
      %v242 = vmul.f32 %v191, %v230
      %v243 = vmul.f32 %v192, %v231
      %v244 = vmul.f32 %v193, %v232
      %v245 = vmul.f32 %v194, %v233
      %v246 = vmul.f32 %v195, %v234
      %v247 = vmul.f32 %v196, %v235
      %v248 = vmul.f32 %v197, %v236
      %v249 = vadd.f32 %v198, %v237
      %v250 = vadd.f32 %v199, %v238
      %v251 = vadd.f32 %v200, %v239
      %v252 = vadd.f32 %v201, %v240
      %v253 = vadd.f32 %v202, %v241
      %v254 = vadd.f32 %v203, %v242
      %v255 = vadd.f32 %v204, %v243
      %v256 = vadd.f32 %v205, %v244
      %v257 = vadd.f32 %v206, %v245
      %v258 = vadd.f32 %v207, %v246
      %v259 = vadd.f32 %v208, %v247
      %v260 = vadd.f32 %v209, %v248
      %261 = vst [vmem:[#allocation2] sm:$0xff] %v249
      %262 = vst [vmem:[#allocation2 + $0x8] sm:$0xff] %v250
      %263 = vst [vmem:[#allocation2 + $0x10] sm:$0xff] %v251
      %264 = vst [vmem:[#allocation2 + $0x18] sm:$0xff] %v252
      %265 = vst [vmem:[#allocation2 + $0x20] sm:$0xff] %v253
      %266 = vst [vmem:[#allocation2 + $0x28] sm:$0xff] %v254
      %267 = vst [vmem:[#allocation2 + $0x30] sm:$0xff] %v255
      %268 = vst [vmem:[#allocation2 + $0x38] sm:$0xff] %v256
      %269 = vst [vmem:[#allocation2 + $0x40] sm:$0xff] %v257
      %270 = vst [vmem:[#allocation2 + $0x48] sm:$0xff] %v258
      %271 = vst [vmem:[#allocation2 + $0x50] sm:$0xff] %v259
      %272 = vst [vmem:[#allocation2 + $0x58] sm:$0xff] %v260
      %s273 = sld [smem:[#allocation6]]
      %s274 = ssub.f32 0.0, %s273
      %v275 = vld [vmem:[#allocation13] sm:$0xff]
      %v276 = vld [vmem:[#allocation13 + $0x8] sm:$0xff]
      %v277 = vld [vmem:[#allocation13 + $0x10] sm:$0xff]
      %v278 = vld [vmem:[#allocation13 + $0x18] sm:$0xff]
      %v279 = vstv %s274
      %v280 = vmul.f32 %v279, %v275
      %v281 = vmul.f32 %v279, %v276
      %v282 = vmul.f32 %v279, %v277
      %v283 = vmul.f32 %v279, %v278
      %v284 = vld [vmem:[%s5] sm:$0xff]
      %v285 = vunpack.c.0.s8 %v284
      %v286 = vunpack.c.1.s8 %v284
      %v287 = vunpack.c.2.s8 %v284
      %v288 = vunpack.c.3.s8 %v284
      %v289 = vcvt.s32.f32 %v285
      %v290 = vcvt.s32.f32 %v286
      %v291 = vcvt.s32.f32 %v287
      %v292 = vcvt.s32.f32 %v288
      %v293 = vmax.f32 %v280, 0.0
      %v294 = vmax.f32 %v281, 0.0
      %v295 = vmax.f32 %v282, 0.0
      %v296 = vmax.f32 %v283, 0.0
      %v297 = vmul.f32 %v280, %v289
      %v298 = vmul.f32 %v281, %v290
      %v299 = vmul.f32 %v282, %v291
      %v300 = vmul.f32 %v283, %v292
      %v301 = vsub.f32 %v293, %v297
      %v302 = vsub.f32 %v294, %v298
      %v303 = vsub.f32 %v295, %v299
      %v304 = vsub.f32 %v296, %v300
      %v305 = vand.u32 2147483647, %v280
      %v306 = vand.u32 2147483647, %v281
      %v307 = vand.u32 2147483647, %v282
      %v308 = vand.u32 2147483647, %v283
      %v309 = vsub.f32 0.0, %v305
      %v310 = vsub.f32 0.0, %v306
      %v311 = vsub.f32 0.0, %v307
      %v312 = vsub.f32 0.0, %v308
      %v313 = vmul.f32 %v309, 1.442695
      %v314 = vpow.pop %v313
      %v315 = vmul.f32 %v310, 1.442695
      %v316 = vpow.pop %v315
      %v317 = vmul.f32 %v311, 1.442695
      %v318 = vpow.pop %v317
      %v319 = vmul.f32 %v312, 1.442695
      %v320 = vpow.pop %v319
      %v321 = vadd.f32 %v314, 1.0
      %v322 = vlog2.pop %v321
      %v323 = vmul.f32 %v322, 0.6931472
      %v324 = vmul.f32 -0.5, %v314
      %v325 = vadd.f32 %v324, 1.0
      %v326 = vmul.f32 %v325, %v314
      %v327 = vand.u32 2147483647, %v314
      %vm328 = vcmp.lt.f32.partialorder %v327, 0.0004427343
      %v329 = vsel %vm328, %v326, %v323
      %v330 = vadd.f32 %v316, 1.0
      %v331 = vlog2.pop %v330
      %v332 = vmul.f32 %v331, 0.6931472
      %v333 = vmul.f32 -0.5, %v316
      %v334 = vadd.f32 %v333, 1.0
      %v335 = vmul.f32 %v334, %v316
      %v336 = vand.u32 2147483647, %v316
      %vm337 = vcmp.lt.f32.partialorder %v336, 0.0004427343
      %v338 = vsel %vm337, %v335, %v332
      %v339 = vadd.f32 %v318, 1.0
      %v340 = vlog2.pop %v339
      %v341 = vmul.f32 %v340, 0.6931472
      %v342 = vmul.f32 -0.5, %v318
      %v343 = vadd.f32 %v342, 1.0
      %v344 = vmul.f32 %v343, %v318
      %v345 = vand.u32 2147483647, %v318
      %vm346 = vcmp.lt.f32.partialorder %v345, 0.0004427343
      %v347 = vsel %vm346, %v344, %v341
      %v348 = vadd.f32 %v320, 1.0
      %v349 = vlog2.pop %v348
      %v350 = vmul.f32 %v349, 0.6931472
      %v351 = vmul.f32 -0.5, %v320
      %v352 = vadd.f32 %v351, 1.0
      %v353 = vmul.f32 %v352, %v320
      %v354 = vand.u32 2147483647, %v320
      %vm355 = vcmp.lt.f32.partialorder %v354, 0.0004427343
      %v356 = vsel %vm355, %v353, %v350
      %v357 = vadd.f32 %v301, %v329
      %v358 = vadd.f32 %v302, %v338
      %v359 = vadd.f32 %v303, %v347
      %v360 = vadd.f32 %v304, %v356
      %v361 = vld [vmem:[#allocation3] sm:$0xff]
      %v362 = vld [vmem:[#allocation3 + $0x8] sm:$0xff]
      %v363 = vld [vmem:[#allocation3 + $0x10] sm:$0xff]
      %v364 = vld [vmem:[#allocation3 + $0x18] sm:$0xff]
      %v365 = vld [vmem:[%s6] sm:$0xff]
      %v366 = vunpack.c.0.s8 %v365
      %v367 = vunpack.c.1.s8 %v365
      %v368 = vunpack.c.2.s8 %v365
      %v369 = vunpack.c.3.s8 %v365
      %v370 = vcvt.s32.f32 %v366
      %v371 = vcvt.s32.f32 %v367
      %v372 = vcvt.s32.f32 %v368
      %v373 = vcvt.s32.f32 %v369
      %v374 = vmul.f32 %v357, %v370
      %v375 = vmul.f32 %v358, %v371
      %v376 = vmul.f32 %v359, %v372
      %v377 = vmul.f32 %v360, %v373
      %v378 = vadd.f32 %v361, %v374
      %v379 = vadd.f32 %v362, %v375
      %v380 = vadd.f32 %v363, %v376
      %v381 = vadd.f32 %v364, %v377
      %382 = vst [vmem:[#allocation3] sm:$0xff] %v378
      %383 = vst [vmem:[#allocation3 + $0x8] sm:$0xff] %v379
      %384 = vst [vmem:[#allocation3 + $0x10] sm:$0xff] %v380
      %385 = vst [vmem:[#allocation3 + $0x18] sm:$0xff] %v381
      %v386 = vld [vmem:[#allocation15] sm:$0xff]
      %v387 = vld [vmem:[#allocation15 + $0x8] sm:$0xff]
      %v388 = vld [vmem:[#allocation15 + $0x10] sm:$0xff]
      %v389 = vld [vmem:[#allocation15 + $0x18] sm:$0xff]
      %s390 = scalar_lea.vmem [#allocation15], 32
      %v391 = vld [vmem:[%s390] sm:$0xff]
      %v392 = vld [vmem:[%s390 + $0x8] sm:$0xff]
      %v393 = vld [vmem:[%s390 + $0x10] sm:$0xff]
      %v394 = vld [vmem:[%s390 + $0x18] sm:$0xff]
      %s395 = scalar_lea.vmem [#allocation15], 64
      %v396 = vld [vmem:[%s395] sm:$0xff]
      %v397 = vld [vmem:[%s395 + $0x8] sm:$0xff]
      %v398 = vld [vmem:[%s395 + $0x10] sm:$0xff]
      %v399 = vld [vmem:[%s395 + $0x18] sm:$0xff]
      %v400 = vmul.f32 %v386, %v386
      %v401 = vmul.f32 %v387, %v387
      %v402 = vmul.f32 %v388, %v388
      %v403 = vmul.f32 %v389, %v389
      %v404 = vmul.f32 %v391, %v391
      %v405 = vmul.f32 %v392, %v392
      %v406 = vmul.f32 %v393, %v393
      %v407 = vmul.f32 %v394, %v394
      %v408 = vadd.f32 %v400, %v404
      %v409 = vadd.f32 %v401, %v405
      %v410 = vadd.f32 %v402, %v406
      %v411 = vadd.f32 %v403, %v407
      %v412 = vmul.f32 %v396, %v396
      %v413 = vmul.f32 %v397, %v397
      %v414 = vmul.f32 %v398, %v398
      %v415 = vmul.f32 %v399, %v399
      %v416 = vadd.f32 %v408, %v412
      %v417 = vadd.f32 %v409, %v413
      %v418 = vadd.f32 %v410, %v414
      %v419 = vadd.f32 %v411, %v415
      %v420 = vrsqrt.pop %v416
      %v421 = vmul.f32 %v416, %v420
      %vm422 = vcmp.eq.f32.partialorder %v416, inf
      %v423 = vsel %vm422, %v416, %v421
      %vm424 = vcmp.eq.f32.partialorder %v416, 0.0
      %v425 = vand.u32 %v416, 2147483648
      %v426 = vsel %vm424, %v425, %v423
      %v427 = vrsqrt.pop %v417
      %v428 = vmul.f32 %v417, %v427
      %vm429 = vcmp.eq.f32.partialorder %v417, inf
      %v430 = vsel %vm429, %v417, %v428
      %vm431 = vcmp.eq.f32.partialorder %v417, 0.0
      %v432 = vand.u32 %v417, 2147483648
      %v433 = vsel %vm431, %v432, %v430
      %v434 = vrsqrt.pop %v418
      %v435 = vmul.f32 %v418, %v434
      %vm436 = vcmp.eq.f32.partialorder %v418, inf
      %v437 = vsel %vm436, %v418, %v435
      %vm438 = vcmp.eq.f32.partialorder %v418, 0.0
      %v439 = vand.u32 %v418, 2147483648
      %v440 = vsel %vm438, %v439, %v437
      %v441 = vrsqrt.pop %v419
      %v442 = vmul.f32 %v419, %v441
      %vm443 = vcmp.eq.f32.partialorder %v419, inf
      %v444 = vsel %vm443, %v419, %v442
      %vm445 = vcmp.eq.f32.partialorder %v419, 0.0
      %v446 = vand.u32 %v419, 2147483648
      %v447 = vsel %vm445, %v446, %v444
      %s448 = smul.u32 0, 4096
      %s449 = ssub.s32 64, %s448
      %v450 = vld [vmem:[#allocation4] sm:$0xff]
      %v451 = vld [vmem:[#allocation4 + $0x8] sm:$0xff]
      %v452 = vld [vmem:[#allocation4 + $0x10] sm:$0xff]
      %v453 = vld [vmem:[#allocation4 + $0x18] sm:$0xff]
      %v454 = vld [vmem:[#allocation5] sm:$0xff]
      %v455 = vld [vmem:[#allocation5 + $0x8] sm:$0xff]
      %v456 = vld [vmem:[#allocation5 + $0x10] sm:$0xff]
      %v457 = vld [vmem:[#allocation5 + $0x18] sm:$0xff]
      %v458 = vstv %s449
      %vm459 = vcmp.lt.s32.totalorder %v454, %v458
      %vm460 = vcmp.lt.s32.totalorder %v455, %v458
      %vm461 = vcmp.lt.s32.totalorder %v456, %v458
      %vm462 = vcmp.lt.s32.totalorder %v457, %v458
      %v463 = vsub.f32 %v426, 1.0
      %v464 = vsub.f32 %v433, 1.0
      %v465 = vsub.f32 %v440, 1.0
      %v466 = vsub.f32 %v447, 1.0
      %v467 = vmul.f32 %v463, %v463
      %v468 = vmul.f32 %v464, %v464
      %v469 = vmul.f32 %v465, %v465
      %v470 = vmul.f32 %v466, %v466
      %v471 = vsel %vm459, %v467, 0.0
      %v472 = vsel %vm460, %v468, 0.0
      %v473 = vsel %vm461, %v469, 0.0
      %v474 = vsel %vm462, %v470, 0.0
      %v475 = vadd.f32 %v450, %v471
      %v476 = vadd.f32 %v451, %v472
      %v477 = vadd.f32 %v452, %v473
      %v478 = vadd.f32 %v453, %v474
      %479 = vst [vmem:[#allocation4] sm:$0xff] %v475
      %480 = vst [vmem:[#allocation4 + $0x8] sm:$0xff] %v476
      %481 = vst [vmem:[#allocation4 + $0x10] sm:$0xff] %v477
      %482 = vst [vmem:[#allocation4 + $0x18] sm:$0xff] %v478
    $region61: #{tpu_custom_call.1} parent=1 // pred_fallthru
      _
    // Predicated region
    $region62: #{tpu_custom_call.1} parent=1 // pred_check
      %p483 = pneg %p103
    $region63: #{tpu_custom_call.1} parent=1 // pred_check_branch
      %485 = sbr.rel (%p483) target = $region65
    $region64: #{tpu_custom_call.1} parent=1 // pred_region
      %v486 = vld [vmem:[#allocation2] sm:$0xff]
      %v487 = vld [vmem:[#allocation2 + $0x8] sm:$0xff]
      %v488 = vld [vmem:[#allocation2 + $0x10] sm:$0xff]
      %v489 = vld [vmem:[#allocation2 + $0x18] sm:$0xff]
      %v490 = vld [vmem:[#allocation2 + $0x20] sm:$0xff]
      %v491 = vld [vmem:[#allocation2 + $0x28] sm:$0xff]
      %v492 = vld [vmem:[#allocation2 + $0x30] sm:$0xff]
      %v493 = vld [vmem:[#allocation2 + $0x38] sm:$0xff]
      %v494 = vld [vmem:[#allocation2 + $0x40] sm:$0xff]
      %v495 = vld [vmem:[#allocation2 + $0x48] sm:$0xff]
      %v496 = vld [vmem:[#allocation2 + $0x50] sm:$0xff]
      %v497 = vld [vmem:[#allocation2 + $0x58] sm:$0xff]
      %498 = vadd.xlane.f32.xlu0 %v486
      %v499 = vpop.xlane.xlu0 %498
      %500 = vadd.xlane.f32.xlu0 %v487
      %v501 = vpop.xlane.xlu0 %500
      %502 = vadd.xlane.f32.xlu0 %v488
      %v503 = vpop.xlane.xlu0 %502
      %504 = vadd.xlane.f32.xlu0 %v489
      %v505 = vpop.xlane.xlu0 %504
      %506 = vadd.xlane.f32.xlu0 %v490
      %v507 = vpop.xlane.xlu0 %506
      %508 = vadd.xlane.f32.xlu0 %v491
      %v509 = vpop.xlane.xlu0 %508
      %510 = vadd.xlane.f32.xlu0 %v492
      %v511 = vpop.xlane.xlu0 %510
      %512 = vadd.xlane.f32.xlu0 %v493
      %v513 = vpop.xlane.xlu0 %512
      %514 = vadd.xlane.f32.xlu0 %v494
      %v515 = vpop.xlane.xlu0 %514
      %516 = vadd.xlane.f32.xlu0 %v495
      %v517 = vpop.xlane.xlu0 %516
      %518 = vadd.xlane.f32.xlu0 %v496
      %v519 = vpop.xlane.xlu0 %518
      %520 = vadd.xlane.f32.xlu0 %v497
      %v521 = vpop.xlane.xlu0 %520
      %v522 = vadd.f32 %v499, %v501
      %v523 = vadd.f32 %v522, %v503
      %v524 = vadd.f32 %v523, %v505
      %v525 = vadd.f32 %v524, %v507
      %v526 = vadd.f32 %v525, %v509
      %v527 = vadd.f32 %v526, %v511
      %v528 = vadd.f32 %v527, %v513
      %v529 = vadd.f32 %v528, %v515
      %v530 = vadd.f32 %v529, %v517
      %v531 = vadd.f32 %v530, %v519
      %v532 = vadd.f32 %v531, %v521
      %v533 = vrot.slane %v532, 4
      %v534 = vadd.f32 %v532, %v533
      %v535 = vrot.slane %v534, 2
      %v536 = vadd.f32 %v534, %v535
      %v537 = vrot.slane %v536, 1
      %v538 = vadd.f32 %v536, %v537
      %vm539 = vcmask 0
      %540 = vst.msk [vmem:[#allocation16] sm:$0x1] %vm539, %v538
      %v541 = vld [vmem:[#allocation3] sm:$0xff]
      %v542 = vld [vmem:[#allocation3 + $0x8] sm:$0xff]
      %v543 = vld [vmem:[#allocation3 + $0x10] sm:$0xff]
      %v544 = vld [vmem:[#allocation3 + $0x18] sm:$0xff]
      %545 = vadd.xlane.f32.xlu0 %v541
      %v546 = vpop.xlane.xlu0 %545
      %547 = vadd.xlane.f32.xlu0 %v542
      %v548 = vpop.xlane.xlu0 %547
      %549 = vadd.xlane.f32.xlu0 %v543
      %v550 = vpop.xlane.xlu0 %549
      %551 = vadd.xlane.f32.xlu0 %v544
      %v552 = vpop.xlane.xlu0 %551
      %v553 = vadd.f32 %v546, %v548
      %v554 = vadd.f32 %v553, %v550
      %v555 = vadd.f32 %v554, %v552
      %v556 = vrot.slane %v555, 4
      %v557 = vadd.f32 %v555, %v556
      %v558 = vrot.slane %v557, 2
      %v559 = vadd.f32 %v557, %v558
      %v560 = vrot.slane %v559, 1
      %v561 = vadd.f32 %v559, %v560
      %562 = vst.msk [vmem:[#allocation17] sm:$0x1] %vm539, %v561
      %v563 = vld [vmem:[#allocation4] sm:$0xff]
      %v564 = vld [vmem:[#allocation4 + $0x8] sm:$0xff]
      %v565 = vld [vmem:[#allocation4 + $0x10] sm:$0xff]
      %v566 = vld [vmem:[#allocation4 + $0x18] sm:$0xff]
      %567 = vadd.xlane.f32.xlu0 %v563
      %v568 = vpop.xlane.xlu0 %567
      %569 = vadd.xlane.f32.xlu0 %v564
      %v570 = vpop.xlane.xlu0 %569
      %571 = vadd.xlane.f32.xlu0 %v565
      %v572 = vpop.xlane.xlu0 %571
      %573 = vadd.xlane.f32.xlu0 %v566
      %v574 = vpop.xlane.xlu0 %573
      %v575 = vadd.f32 %v568, %v570
      %v576 = vadd.f32 %v575, %v572
      %v577 = vadd.f32 %v576, %v574
      %v578 = vrot.slane %v577, 4
      %v579 = vadd.f32 %v577, %v578
      %v580 = vrot.slane %v579, 2
      %v581 = vadd.f32 %v579, %v580
      %v582 = vrot.slane %v581, 1
      %v583 = vadd.f32 %v581, %v582
      %584 = vst.msk [vmem:[#allocation19] sm:$0x1] %vm539, %v583
    $region65: #{tpu_custom_call.1} parent=1 // pred_fallthru
      _
    // Predicated region
    $region66: #{tpu_custom_call.1} parent=1 // pred_check
      _
    $region67: #{tpu_custom_call.1} parent=1 // pred_check_branch
      %586 = sbr.rel (0) target = $region69
    $region68: #{tpu_custom_call.1} parent=1 // pred_region
      %s588 = ssub.s32 16, 16
      %589 = vsyncadd [#allocation9], %s588
      %s591 = sshll.u32 [#allocation16], 4
      %s592 = int_to_ptr.vmem [resolvable:$true] %s591
      %594 = dma.vmem_to_hbm [thread:$0]  %s592, 16, %s8, [#allocation9]
    $region69: #{tpu_custom_call.1} parent=1 // pred_fallthru
      _
    // Predicated region
    $region70: #{tpu_custom_call.1} parent=1 // pred_check
      _
    $region71: #{tpu_custom_call.1} parent=1 // pred_check_branch
      %596 = sbr.rel (0) target = $region73
    $region72: #{tpu_custom_call.1} parent=1 // pred_region
      %s598 = ssub.s32 16, 16
      %599 = vsyncadd [#allocation18], %s598
      %s601 = sshll.u32 [#allocation17], 4
      %s602 = int_to_ptr.vmem [resolvable:$true] %s601
      %604 = dma.vmem_to_hbm [thread:$0]  %s602, 16, %s9, [#allocation18]
    $region73: #{tpu_custom_call.1} parent=1 // pred_fallthru
      _
    // Predicated region
    $region74: #{tpu_custom_call.1} parent=1 // pred_check
      _
    $region75: #{tpu_custom_call.1} parent=1 // pred_check_branch
      %606 = sbr.rel (0) target = $region77
    $region76: #{tpu_custom_call.1} parent=1 // pred_region
      %s608 = ssub.s32 16, 16
      %609 = vsyncadd [#allocation18], %s608
      %s611 = sshll.u32 [#allocation19], 4
      %s612 = int_to_ptr.vmem [resolvable:$true] %s611
      %614 = dma.vmem_to_hbm [thread:$0]  %s612, 16, %s10, [#allocation18]
    $region77: #{tpu_custom_call.1} parent=1 // pred_fallthru
      _
    // Predicated region
    $region78: #{tpu_custom_call.1} parent=1 // pred_check
      _
    $region79: #{tpu_custom_call.1} parent=1 // pred_check_branch
      %616 = sbr.rel (0) target = $region81
    $region80: #{tpu_custom_call.1} parent=1 // pred_region
      %617 = dma.done [#allocation9], 16
    $region81: #{tpu_custom_call.1} parent=1 // pred_fallthru
      _
    // Predicated region
    $region82: #{tpu_custom_call.1} parent=1 // pred_check
      _
    $region83: #{tpu_custom_call.1} parent=1 // pred_check_branch
      %619 = sbr.rel (0) target = $region85
    $region84: #{tpu_custom_call.1} parent=1 // pred_region
      %620 = dma.done [#allocation18], 16
    $region85: #{tpu_custom_call.1} parent=1 // pred_fallthru
      _
    // Predicated region
    $region86: #{tpu_custom_call.1} parent=1 // pred_check
      _
    $region87: #{tpu_custom_call.1} parent=1 // pred_check_branch
      %622 = sbr.rel (0) target = $region89
    $region88: #{tpu_custom_call.1} parent=1 // pred_region
      %623 = dma.done [#allocation18], 16
    $region89: #{tpu_custom_call.1} parent=1 // pred_fallthru
      _
    %624 = vsyncpa [#allocation8], 1
    %625 = vsyncpa [#allocation11], 1
    %626 = vsyncpa [#allocation14], 1
    %627 = vsyncpa [#allocation9], 1
    %628 = vsyncpa [#allocation18], 1

</llo_original>
